<compile_context>
chip_gen: v6e
topology: v6e:2x2x1
jax: 0.10.0
libtpu: 0.0.40
codegen_flags: <defaults>
</compile_context>

<pallas_src>
import functools
import math

import jax
import jax.numpy as jnp
from jax.experimental import pallas as pl
from jax.experimental.pallas import tpu as pltpu


def _ce_kernel(x_ref, y_ref, o_ref, m_sc, s_sc, p_sc, *,
               eps, input_logits, n_rows, n_cols, mask_rows, mask_cols):
    ri = pl.program_id(0)          # row-tile index ("parallel")
    cj = pl.program_id(1)          # C-tile index  ("arbitrary", innermost)
    n_c = pl.num_programs(1)

    @pl.when(cj == 0)
    def _init():
        m_sc[...] = jnp.full_like(m_sc, -jnp.inf)
        s_sc[...] = jnp.zeros_like(s_sc)
        p_sc[...] = jnp.zeros_like(p_sc)

    x = x_ref[...]                 # (tn, tc) in the native dtype (bf16 stays bf16)
    y = y_ref[...]                 # (tn, 1) int32 targets
    rows, cols = x.shape

    # Global column ids of this C tile.
    col = jax.lax.broadcasted_iota(jnp.int32, (rows, cols), 1) + cj * cols

    # Target pick in the native dtype (exact: select + single nonzero per row),
    # accumulated in f32 across C tiles.  No f32 one-hot is materialized.
    zero = jnp.zeros((), dtype=x.dtype)
    picked_tile = jnp.sum(jnp.where(col == y, x, zero), axis=-1, keepdims=True)
    p_sc[...] += picked_tile.astype(jnp.float32)

    if input_logits:
        if mask_cols:
            # Ragged last C tile: neutralize out-of-range columns for max/exp.
            neg_inf = jnp.asarray(-jnp.inf, dtype=x.dtype)
            x = jnp.where(col < n_cols, x, neg_inf)
        # Row max in the native dtype (exact); only the exp chain is f32.
        m_tile = jnp.max(x, axis=-1, keepdims=True).astype(jnp.float32)
        m_old = m_sc[...]
        m_new = jnp.maximum(m_old, m_tile)
        s_tile = jnp.sum(jnp.exp(x.astype(jnp.float32) - m_new),
                         axis=-1, keepdims=True)
        s_sc[...] = s_sc[...] * jnp.exp(m_old - m_new) + s_tile
        m_sc[...] = m_new

    @pl.when(cj == n_c - 1)
    def _finalize():
        picked = p_sc[...]
        if input_logits:
            # torch: clamp(softmax(x), eps).log()[y]
            #      == max(x_y - m - log(sum exp(x - m)), log(eps))
            logp_y = picked - m_sc[...] - jnp.log(s_sc[...])
            logp_y = jnp.maximum(logp_y, jnp.float32(math.log(eps)))
        else:
            # x already holds probabilities; only the picked entry matters.
            logp_y = jnp.log(jnp.maximum(picked, jnp.float32(eps)))
        if mask_rows:
            # Ragged last row tile: zero out rows past the real batch size.
            row = ri * rows + jax.lax.broadcasted_iota(jnp.int32, (rows, 1), 0)
            logp_y = jnp.where(row < n_rows, logp_y, 0.0)
        part = jnp.sum(logp_y)                       # scalar partial for this row tile
        o_ref[...] = jnp.broadcast_to(part, (1, 1, 128))   # lane-dense block write


def _vmem_capacity_bytes():
    try:
        info = pltpu.get_tpu_info()
        cap = int(getattr(info, "vmem_capacity_bytes", 0) or 0)
        if cap > 0:
            return cap
    except Exception:
        pass
    return 64 * 1024 * 1024        # conservative default: v7x per-TensorCore VMEM


def _tile_sizes(n, c, block_rows=None, block_cols=None):
    """Pick (tn, tc, vmem_limit_bytes).

    The x-tile budget is expressed in f32-equivalent bytes and leaves room for
    the 2x double-buffered input plus the f32 upcast / exp / iota intermediates
    (~5-6x one f32 tile in total) under the scoped VMEM limit.
    """
    cap = _vmem_capacity_bytes()
    vmem_limit = min(cap * 3 // 4, 96 * 1024 * 1024)   # ~48 MiB on v7x, 96 MiB on v5e/v6e
    budget = max(vmem_limit // 6, 512 * 1024)          # f32-equivalent bytes per x tile

    # Columns: full C when 8 sublane rows fit the budget, else a 128-aligned slice
    # (the online LSE over the C grid axis handles the rest).
    if block_cols is not None:
        tc = min(int(block_cols), c)
        if tc < c:
            tc = max(128, (tc // 128) * 128)
    elif 8 * c * 4 <= budget:
        tc = c
    else:
        tc = max(128, (budget // (8 * 4)) // 128 * 128)
        tc = min(tc, c)

    # Rows: as many as fit the budget; sublane-aligned unless the block is full-N.
    if block_rows is not None:
        tn = min(int(block_rows), n)
    else:
        tn = min(max(1, budget // (tc * 4)), n)
    if tn < n:
        tn = max(8, (tn // 8) * 8)
        tn = min(tn, n)
    return tn, tc, int(vmem_limit)


def cross_entropy_loss(x, y, eps=1e-32, input_logits=True,
                       block_rows=None, block_cols=None):
    n, c = x.shape
    y2 = y.astype(jnp.int32).reshape(n, 1)

    tn, tc, vmem_limit = _tile_sizes(n, c, block_rows, block_cols)
    num_row_tiles = pl.cdiv(n, tn)
    num_c_tiles = pl.cdiv(c, tc)
    mask_rows = (n % tn) != 0
    mask_cols = (c % tc) != 0

    kernel = functools.partial(
        _ce_kernel, eps=eps, input_logits=input_logits,
        n_rows=n, n_cols=c, mask_rows=mask_rows, mask_cols=mask_cols)

    cost = pl.CostEstimate(
        flops=5 * n * c,
        transcendentals=(n * c + n) if input_logits else n,
        bytes_accessed=n * c * x.dtype.itemsize + n * 4 * num_c_tiles
                       + num_row_tiles * 128 * 4,
    )

    partials = pl.pallas_call(
        kernel,
        out_shape=jax.ShapeDtypeStruct((num_row_tiles, 1, 128), jnp.float32),
        grid_spec=pltpu.PrefetchScalarGridSpec(
            num_scalar_prefetch=0,
            grid=(num_row_tiles, num_c_tiles),
            in_specs=[
                pl.BlockSpec((tn, tc), lambda ri, cj: (ri, cj)),
                pl.BlockSpec((tn, 1), lambda ri, cj: (ri, 0)),
            ],
            out_specs=pl.BlockSpec((1, 1, 128), lambda ri, cj: (ri, 0, 0)),
            scratch_shapes=[
                pltpu.VMEM((tn, 1), jnp.float32),   # running row max
                pltpu.VMEM((tn, 1), jnp.float32),   # running sum(exp)
                pltpu.VMEM((tn, 1), jnp.float32),   # picked x[y]
            ],
        ),
        compiler_params=pltpu.CompilerParams(
            # rows are independent (megacore-shardable on v7x); C carries the
            # online-LSE scratch -> reduction axis.
            dimension_semantics=("parallel", "arbitrary"),
            vmem_limit_bytes=vmem_limit,
        ),
        cost_estimate=cost,
    )(x, y2)

    # Final short reduction / negate / mean in plain JAX (numerically safer than a
    # carried scalar accumulator, and required for the parallel row axis).
    return -(jnp.sum(partials[:, 0, 0]) / jnp.float32(n))


def _reference(x, y, eps=1e-32, input_logits=True):
    xf = x.astype(jnp.float32)
    p = jax.nn.softmax(xf, axis=-1) if input_logits else xf
    logp = jnp.log(jnp.maximum(p, eps))
    return -jnp.mean(logp[jnp.arange(x.shape[0]), y])


if __name__ == "__main__":
    key = jax.random.PRNGKey(0)
    kx, ky, kx3, ky3 = jax.random.split(key, 4)

    # Case 1: logits path, f32, single tile.
    N, C = 8, 128
    x = jax.random.normal(kx, (N, C), dtype=jnp.float32)
    y = jax.random.randint(ky, (N,), 0, C, dtype=jnp.int32)
    loss = cross_entropy_loss(x, y)
    jax.block_until_ready(loss)
    ref = _reference(x, y)
    assert jnp.allclose(loss, ref, atol=1e-4, rtol=1e-4), (loss, ref)

    # Case 2: bf16 passthrough, multi row-tile grid with a ragged (masked) last tile.
    N2, C2 = 12, 128
    x2 = jax.random.normal(kx, (N2, C2), dtype=jnp.bfloat16)
    y2 = jax.random.randint(ky, (N2,), 0, C2, dtype=jnp.int32)
    loss2 = cross_entropy_loss(x2, y2, block_rows=8)
    jax.block_until_ready(loss2)
    ref2 = _reference(x2, y2)
    assert jnp.allclose(loss2, ref2, atol=1e-4, rtol=1e-4), (loss2, ref2)

    # Case 3: C-axis split (online LSE) with ragged last C tile AND ragged rows.
    N3, C3 = 12, 320
    x3 = jax.random.normal(kx3, (N3, C3), dtype=jnp.float32)
    y3 = jax.random.randint(ky3, (N3,), 0, C3, dtype=jnp.int32)
    loss3 = cross_entropy_loss(x3, y3, block_rows=8, block_cols=128)
    jax.block_until_ready(loss3)
    ref3 = _reference(x3, y3)
    assert jnp.allclose(loss3, ref3, atol=1e-4, rtol=1e-4), (loss3, ref3)

    # Case 4: probabilities path (input_logits=False).
    p = jax.nn.softmax(x, axis=-1)
    loss4 = cross_entropy_loss(p, y, input_logits=False)
    jax.block_until_ready(loss4)
    ref4 = -jnp.mean(jnp.log(jnp.maximum(p, 1e-32))[jnp.arange(N), y])
    assert jnp.allclose(loss4, ref4, atol=1e-4, rtol=1e-4), (loss4, ref4)

    print("KERNEL_OK")
</pallas_src>

<mosaic_0001>
module attributes {stable_mosaic.version = 11 : i64} {
  func.func @_ce_kernel(%arg0: i32, %arg1: i32, %arg2: memref<8x128xf32, #tpu.memory_space<vmem>>, %arg3: memref<8x1xi32, #tpu.memory_space<vmem>>, %arg4: memref<1x1x128xf32, #tpu.memory_space<vmem>>, %arg5: memref<8x1xf32, #tpu.memory_space<vmem>>, %arg6: memref<8x1xf32, #tpu.memory_space<vmem>>, %arg7: memref<8x1xf32, #tpu.memory_space<vmem>>) attributes {dimension_semantics = [#tpu.dimension_semantics<parallel>, #tpu.dimension_semantics<arbitrary>], iteration_bounds = array<i64: 1, 1>, scalar_prefetch = 0 : i64, scratch_operands = 3 : i64, tpu.core_type = #tpu.core_type<tc>, window_params = [{transform_indices = @transform_0, window_bounds = array<i64: 8, 128>}, {transform_indices = @transform_1, window_bounds = array<i64: 8, 1>}, {transform_indices = @transform_2, window_bounds = array<i64: 1, 1, 128>}]} {
    %c0_i32 = arith.constant 0 : i32
    %0 = arith.cmpi eq, %arg1, %c0_i32 : i32
    %1 = arith.extui %0 : i1 to i32
    %c0_i32_0 = arith.constant 0 : i32
    %2 = arith.cmpi ne, %1, %c0_i32_0 : i32
    scf.if %2 {
      %cst_21 = arith.constant 0xFF800000 : f32
      %37 = vector.broadcast %cst_21 : f32 to vector<8x1xf32>
      %c0_22 = arith.constant 0 : index
      %c0_23 = arith.constant 0 : index
      %38 = vector.load %arg5[%c0_22, %c0_23] : memref<8x1xf32, #tpu.memory_space<vmem>>, vector<8x1xf32>
      tpu.vector_store %arg5[%c0_22, %c0_23], %37 {strides = array<i32>} : memref<8x1xf32, #tpu.memory_space<vmem>>, vector<8x1xf32>,
      %cst_24 = arith.constant 0.000000e+00 : f32
      %39 = vector.broadcast %cst_24 : f32 to vector<8x1xf32>
      %c0_25 = arith.constant 0 : index
      %c0_26 = arith.constant 0 : index
      %40 = vector.load %arg6[%c0_25, %c0_26] : memref<8x1xf32, #tpu.memory_space<vmem>>, vector<8x1xf32>
      tpu.vector_store %arg6[%c0_25, %c0_26], %39 {strides = array<i32>} : memref<8x1xf32, #tpu.memory_space<vmem>>, vector<8x1xf32>,
      %cst_27 = arith.constant 0.000000e+00 : f32
      %41 = vector.broadcast %cst_27 : f32 to vector<8x1xf32>
      %c0_28 = arith.constant 0 : index
      %c0_29 = arith.constant 0 : index
      %42 = vector.load %arg7[%c0_28, %c0_29] : memref<8x1xf32, #tpu.memory_space<vmem>>, vector<8x1xf32>
      tpu.vector_store %arg7[%c0_28, %c0_29], %41 {strides = array<i32>} : memref<8x1xf32, #tpu.memory_space<vmem>>, vector<8x1xf32>,
    } else {
    }
    %c0 = arith.constant 0 : index
    %c0_1 = arith.constant 0 : index
    %3 = vector.load %arg2[%c0, %c0_1] : memref<8x128xf32, #tpu.memory_space<vmem>>, vector<8x128xf32>
    %c0_2 = arith.constant 0 : index
    %c0_3 = arith.constant 0 : index
    %4 = vector.load %arg3[%c0_2, %c0_3] : memref<8x1xi32, #tpu.memory_space<vmem>>, vector<8x1xi32>
    %5 = tpu.iota {dimensions = array<i32: 1>} : vector<8x128xi32>
    %c128_i32 = arith.constant 128 : i32
    %6 = arith.muli %arg1, %c128_i32 : i32
    %7 = vector.broadcast %6 : i32 to vector<8x128xi32>
    %8 = arith.addi %5, %7 : vector<8x128xi32>
    %9 = vector.broadcast %4 : vector<8x1xi32> to vector<8x128xi32>
    %10 = arith.cmpi eq, %8, %9 : vector<8x128xi32>
    %cst = arith.constant 0.000000e+00 : f32
    %11 = vector.broadcast %cst : f32 to vector<8x128xf32>
    %12 = arith.select %10, %3, %11 : vector<8x128xi1>, vector<8x128xf32>
    %cst_4 = arith.constant dense<0.000000e+00> : vector<8xf32>
    %13 = vector.multi_reduction <add>, %12, %cst_4 [1] : vector<8x128xf32> to vector<8xf32>
    %14 = vector.shape_cast %13 : vector<8xf32> to vector<8x1xf32>
    %c0_5 = arith.constant 0 : index
    %c0_6 = arith.constant 0 : index
    %15 = vector.load %arg7[%c0_5, %c0_6] : memref<8x1xf32, #tpu.memory_space<vmem>>, vector<8x1xf32>
    %16 = arith.addf %15, %14 : vector<8x1xf32>
    %c0_7 = arith.constant 0 : index
    %c0_8 = arith.constant 0 : index
    %17 = vector.load %arg7[%c0_7, %c0_8] : memref<8x1xf32, #tpu.memory_space<vmem>>, vector<8x1xf32>
    tpu.vector_store %arg7[%c0_7, %c0_8], %16 {strides = array<i32>} : memref<8x1xf32, #tpu.memory_space<vmem>>, vector<8x1xf32>,
    %cst_9 = arith.constant dense<0xFF800000> : vector<8xf32>
    %18 = vector.multi_reduction <maximumf>, %3, %cst_9 [1] : vector<8x128xf32> to vector<8xf32>
    %19 = vector.shape_cast %18 : vector<8xf32> to vector<8x1xf32>
    %c0_10 = arith.constant 0 : index
    %c0_11 = arith.constant 0 : index
    %20 = vector.load %arg5[%c0_10, %c0_11] : memref<8x1xf32, #tpu.memory_space<vmem>>, vector<8x1xf32>
    %21 = arith.maximumf %20, %19 : vector<8x1xf32>
    %22 = vector.broadcast %21 : vector<8x1xf32> to vector<8x128xf32>
    %23 = arith.subf %3, %22 : vector<8x128xf32>
    %24 = math.exp %23 : vector<8x128xf32>
    %cst_12 = arith.constant dense<0.000000e+00> : vector<8xf32>
    %25 = vector.multi_reduction <add>, %24, %cst_12 [1] : vector<8x128xf32> to vector<8xf32>
    %26 = vector.shape_cast %25 : vector<8xf32> to vector<8x1xf32>
    %c0_13 = arith.constant 0 : index
    %c0_14 = arith.constant 0 : index
    %27 = vector.load %arg6[%c0_13, %c0_14] : memref<8x1xf32, #tpu.memory_space<vmem>>, vector<8x1xf32>
    %28 = arith.subf %20, %21 : vector<8x1xf32>
    %29 = math.exp %28 : vector<8x1xf32>
    %30 = arith.mulf %27, %29 : vector<8x1xf32>
    %31 = arith.addf %30, %26 : vector<8x1xf32>
    %c0_15 = arith.constant 0 : index
    %c0_16 = arith.constant 0 : index
    %32 = vector.load %arg6[%c0_15, %c0_16] : memref<8x1xf32, #tpu.memory_space<vmem>>, vector<8x1xf32>
    tpu.vector_store %arg6[%c0_15, %c0_16], %31 {strides = array<i32>} : memref<8x1xf32, #tpu.memory_space<vmem>>, vector<8x1xf32>,
    %c0_17 = arith.constant 0 : index
    %c0_18 = arith.constant 0 : index
    %33 = vector.load %arg5[%c0_17, %c0_18] : memref<8x1xf32, #tpu.memory_space<vmem>>, vector<8x1xf32>
    tpu.vector_store %arg5[%c0_17, %c0_18], %21 {strides = array<i32>} : memref<8x1xf32, #tpu.memory_space<vmem>>, vector<8x1xf32>,
    %c0_i32_19 = arith.constant 0 : i32
    %34 = arith.cmpi eq, %arg1, %c0_i32_19 : i32
    %35 = arith.extui %34 : i1 to i32
    %c0_i32_20 = arith.constant 0 : i32
    %36 = arith.cmpi ne, %35, %c0_i32_20 : i32
    scf.if %36 {
      %c0_21 = arith.constant 0 : index
      %c0_22 = arith.constant 0 : index
      %37 = vector.load %arg7[%c0_21, %c0_22] : memref<8x1xf32, #tpu.memory_space<vmem>>, vector<8x1xf32>
      %c0_23 = arith.constant 0 : index
      %c0_24 = arith.constant 0 : index
      %38 = vector.load %arg5[%c0_23, %c0_24] : memref<8x1xf32, #tpu.memory_space<vmem>>, vector<8x1xf32>
      %39 = arith.subf %37, %38 : vector<8x1xf32>
      %c0_25 = arith.constant 0 : index
      %c0_26 = arith.constant 0 : index
      %40 = vector.load %arg6[%c0_25, %c0_26] : memref<8x1xf32, #tpu.memory_space<vmem>>, vector<8x1xf32>
      %41 = math.log %40 : vector<8x1xf32>
      %42 = arith.subf %39, %41 : vector<8x1xf32>
      %cst_27 = arith.constant -73.6827239 : f32
      %43 = vector.broadcast %cst_27 : f32 to vector<8x1xf32>
      %44 = arith.maximumf %42, %43 : vector<8x1xf32>
      %45 = vector.shape_cast %44 : vector<8x1xf32> to vector<1x8x1xf32>
      %cst_28 = arith.constant dense<0.000000e+00> : vector<1xf32>
      %46 = vector.multi_reduction <add>, %45, %cst_28 [1, 2] : vector<1x8x1xf32> to vector<1xf32>
      %47 = vector.shape_cast %46 : vector<1xf32> to vector<1x1x1xf32>
      %48 = vector.extract %47[0, 0, 0] : f32 from vector<1x1x1xf32>
      %49 = vector.broadcast %48 : f32 to vector<1x1x128xf32>
      %c0_29 = arith.constant 0 : index
      %c0_30 = arith.constant 0 : index
      %c0_31 = arith.constant 0 : index
      %50 = vector.load %arg4[%c0_29, %c0_30, %c0_31] : memref<1x1x128xf32, #tpu.memory_space<vmem>>, vector<1x1x128xf32>
      tpu.vector_store %arg4[%c0_29, %c0_30, %c0_31], %49 {strides = array<i32>} : memref<1x1x128xf32, #tpu.memory_space<vmem>>, vector<1x1x128xf32>,
    } else {
    }
    return
  }
  func.func @transform_0(%arg0: i32, %arg1: i32) -> (i32, i32) {
    %c0_i32 = arith.constant 0 : i32
    return %arg0, %arg1 : i32, i32
  }
  func.func @transform_1(%arg0: i32, %arg1: i32) -> (i32, i32) {
    %c0_i32 = arith.constant 0 : i32
    %c0_i32_0 = arith.constant 0 : i32
    return %arg0, %c0_i32 : i32, i32
  }
  func.func @transform_2(%arg0: i32, %arg1: i32) -> (i32, i32, i32) {
    %c0_i32 = arith.constant 0 : i32
    %c0_i32_0 = arith.constant 0 : i32
    %c0_i32_1 = arith.constant 0 : i32
    return %arg0, %c0_i32, %c0_i32_0 : i32, i32, i32
  }
}

</mosaic_0001>

<llo_original>
// kernel: tpu_custom_call.1
$region0: #{tpu_custom_call.1}
  #allocation0 [shape = 'u32[]', space=smem, size = 0x4, offset = 0x4, fixed_abs, tag = 'smem constant byte address 0x4 - core index']
  #allocation1 [shape = 'u32[144,128]{1,0:T(1,128)}', space=vmem, size = 0x12000, scoped, tag = 'internal scratch']
  #allocation2 [shape = 'f32[8,1]{1,0:T(8,128)}', space=vmem, size = 0x1000, scoped, tag = 'scratch operand']
  #allocation3 [shape = 'f32[8,1]{1,0:T(8,128)}', space=vmem, size = 0x1000, scoped, tag = 'scratch operand']
  #allocation4 [shape = 'f32[8,1]{1,0:T(8,128)}', space=vmem, size = 0x1000, scoped, tag = 'scratch operand']
  %s0 = inlined_call_operand.vmem [shape: f32[8,128], index: 0, kind: input, shape index: {}]
  %s1 = inlined_call_operand.vmem [shape: s32[8,1], index: 1, kind: input, shape index: {}]
  %s2 = inlined_call_operand.hbm [shape: f32[1,1,128], index: 2, kind: output, shape index: {}]
  %s3 = sld [smem:[#allocation0]]
  $region26: #{tpu_custom_call.1} parent=0
    _
  %s5 = ssub.s32 1, %s3
  %s6 = scalar_select 0, %s5, %s3
  $region1: #{tpu_custom_call.1} parent=0
    #allocation5 [shape = 'u8[512]{0}', space=vmem, size = 0x400, scoped, tag = 'output window, operand 0, single buffered']
    #allocation6 [shape = 's32[1]{0}', space=sflag, size = 0x4, scoped, tag = 'scoped memory for tpu_custom_call.1']
    %7 = vsyncpa [#allocation6], 0
    // Predicated region
    $region2: #{tpu_custom_call.1} parent=1 // pred_check
      _
    $region3: #{tpu_custom_call.1} parent=1 // pred_check_branch
      %9 = sbr.rel (0) target = $region5
    $region4: #{tpu_custom_call.1} parent=1 // pred_region
      _
    $region5: #{tpu_custom_call.1} parent=1 // pred_fallthru
      _
    // Predicated region
    $region6: #{tpu_custom_call.1} parent=1 // pred_check
      _
    $region7: #{tpu_custom_call.1} parent=1 // pred_check_branch
      %11 = sbr.rel (0) target = $region9
    $region8: #{tpu_custom_call.1} parent=1 // pred_region
      _
    $region9: #{tpu_custom_call.1} parent=1 // pred_fallthru
      _
    %p12 = scmp.eq.s32.totalorder 0, 0
    // Predicated region
    $region10: #{tpu_custom_call.1} parent=1 // pred_check
      %p13 = pneg %p12
    $region11: #{tpu_custom_call.1} parent=1 // pred_check_branch
      %15 = sbr.rel (%p13) target = $region13
    $region12: #{tpu_custom_call.1} parent=1 // pred_region
      %vm16 = vcmask 7168
      %17 = vst.msk [vmem:[#allocation2] sm:$0xff] %vm16, -inf
      %18 = vst.msk [vmem:[#allocation3] sm:$0xff] %vm16, 0.0
      %19 = vst.msk [vmem:[#allocation4] sm:$0xff] %vm16, 0.0
    $region13: #{tpu_custom_call.1} parent=1 // pred_fallthru
      _
    %v20 = vld [vmem:[%s0] sm:$0xff]
    %v21 = vld [vmem:[%s1] sm:$0xff]
    %v22 = vlaneseq
    %v23 = vand.u32 %v22, 127
    %s24 = smul.u32 0, 128
    %v25 = vstv %s24
    %v26 = vadd.s32 %v23, %v25
    %27 = vset.pattern.permute.xlu0 0
    %28 = vperm.xlu0 %27, %v21
    %v29 = vpop.permute.xlu0 %28
    %vm30 = vcmp.eq.s32.totalorder %v26, %v29
    %v31 = vsel %vm30, %v20, 0.0
    %32 = vadd.xlane.f32.xlu0 %v31
    %v33 = vpop.xlane.xlu0 %32
    %v34 = vld [vmem:[#allocation4] sm:$0xff]
    %v35 = vadd.f32 %v34, %v33
    %vm36 = vcmask 7168
    %37 = vst.msk [vmem:[#allocation4] sm:$0xff] %vm36, %v35
    %38 = vmax.xlane.f32.xlu0 %v20
    %v39 = vpop.xlane.xlu0 %38
    %v40 = vld [vmem:[#allocation2] sm:$0xff]
    %v41 = vmax.f32 %v40, %v39
    %43 = vset.pattern.permute.xlu0 0
    %44 = vperm.xlu0 %43, %v41
    %v45 = vpop.permute.xlu0 %44
    %v47 = vsub.f32 %v20, %v45
    %v48 = vmul.f32 %v47, 1.442695
    %v49 = vpow.pop %v48
    %50 = vadd.xlane.f32.xlu0 %v49
    %v51 = vpop.xlane.xlu0 %50
    %v52 = vld [vmem:[#allocation3] sm:$0xff]
    %v53 = vsub.f32 %v40, %v41
    %v54 = vmul.f32 %v53, 1.442695
    %v55 = vpow.pop %v54
    %v56 = vmul.f32 %v52, %v55
    %v57 = vadd.f32 %v56, %v51
    %58 = vst.msk [vmem:[#allocation3] sm:$0xff] %vm36, %v57
    %59 = vst.msk [vmem:[#allocation2] sm:$0xff] %vm36, %v41
    // Predicated region
    $region14: #{tpu_custom_call.1} parent=1 // pred_check
      %p60 = pneg %p12
    $region15: #{tpu_custom_call.1} parent=1 // pred_check_branch
      %62 = sbr.rel (%p60) target = $region17
    $region16: #{tpu_custom_call.1} parent=1 // pred_region
      %v63 = vld [vmem:[#allocation4] sm:$0xff]
      %v64 = vld [vmem:[#allocation2] sm:$0xff]
      %v65 = vsub.f32 %v63, %v64
      %v66 = vld [vmem:[#allocation3] sm:$0xff]
      %v67 = vlog2.pop %v66
      %v68 = vmul.f32 %v67, 0.6931472
      %v69 = vsub.f32 %v65, %v68
      %v70 = vmax.f32 %v69, -73.682724
      %v71 = vsel %vm36, %v70, 0.0
      %72 = vadd.xlane.f32.xlu0 %v71
      %v73 = vpop.xlane.xlu0 %72
      %v74 = vrot.slane %v73, 4
      %v75 = vadd.f32 %v73, %v74
      %v76 = vrot.slane %v75, 2
      %v77 = vadd.f32 %v75, %v76
      %v78 = vrot.slane %v77, 1
      %v79 = vadd.f32 %v77, %v78
      %s80 = vtos %v79
      %v81 = vstv %s80
      %82 = vst [vmem:[#allocation5] sm:$0x1] %v81
    $region17: #{tpu_custom_call.1} parent=1 // pred_fallthru
      _
    // Predicated region
    $region18: #{tpu_custom_call.1} parent=1 // pred_check
      _
    $region19: #{tpu_custom_call.1} parent=1 // pred_check_branch
      %84 = sbr.rel (0) target = $region21
    $region20: #{tpu_custom_call.1} parent=1 // pred_region
      %s86 = ssub.s32 16, 16
      %87 = vsyncadd [#allocation6], %s86
      %s89 = sshll.u32 [#allocation5], 4
      %s90 = int_to_ptr.vmem [resolvable:$true] %s89
      %92 = dma.vmem_to_hbm [thread:$0]  %s90, 16, %s2, [#allocation6]
    $region21: #{tpu_custom_call.1} parent=1 // pred_fallthru
      _
    // Predicated region
    $region22: #{tpu_custom_call.1} parent=1 // pred_check
      _
    $region23: #{tpu_custom_call.1} parent=1 // pred_check_branch
      %94 = sbr.rel (0) target = $region25
    $region24: #{tpu_custom_call.1} parent=1 // pred_region
      %95 = dma.done [#allocation6], 16
    $region25: #{tpu_custom_call.1} parent=1 // pred_fallthru
      _
    %96 = vsyncpa [#allocation6], 1

</llo_original>
